<compile_context>
chip_gen: v6e
topology: v6e:2x2x1
jax: 0.10.0
libtpu: 0.0.40
codegen_flags: <defaults>
</compile_context>

<pallas_src>
import functools
import math

import jax
import jax.numpy as jnp
from jax.experimental import pallas as pl
from jax.experimental.pallas import tpu as pltpu


# ----------------------------- activation zoo ------------------------------

def _apply_activation(x, activation):
    if activation == "relu":
        return jnp.maximum(x, 0.0)
    if activation == "gelu":
        return jax.nn.gelu(x, approximate=False)
    if activation == "tanh":
        return jnp.tanh(x)
    if activation == "sigmoid":
        return jax.nn.sigmoid(x)
    if activation == "leaky_relu":
        return jnp.where(x >= 0, x, 0.2 * x)
    if activation == "silu":
        return x * jax.nn.sigmoid(x)
    raise ValueError(f"Invalid activation: {activation}")


# --------------------------------- kernel ----------------------------------

def _mlp_kernel(x_ref, wg_ref, wu_ref, wd_ref, o_ref, acc_ref, *, activation):
    h_idx = pl.program_id(1)

    @pl.when(h_idx == 0)
    def _():
        acc_ref[...] = jnp.zeros_like(acc_ref)

    x = x_ref[...]
    # gate / up projections for this hidden slab (MXU, f32 accumulation)
    gate = jnp.dot(x, wg_ref[...], preferred_element_type=jnp.float32)
    up = jnp.dot(x, wu_ref[...], preferred_element_type=jnp.float32)
    h = (_apply_activation(gate, activation) * up).astype(wd_ref.dtype)
    # partial down-projection, accumulated across hidden slabs
    acc_ref[...] += jnp.dot(h, wd_ref[...], preferred_element_type=jnp.float32)

    @pl.when(h_idx == pl.num_programs(1) - 1)
    def _():
        o_ref[...] = acc_ref[...].astype(o_ref.dtype)


# ------------------------------ tile selection ------------------------------

def _round_up(x, m):
    return (x + m - 1) // m * m


def _pick_tiles(rows, hidden, in_dim, itemsize,
                budget_bytes=40 * 1024 * 1024):
    # Row tile: big (good HBM streaming), sublane-friendly for f32 and bf16.
    tm = min(256, _round_up(rows, 16))

    # Hidden tile: largest of {512, 256, 128} that divides hidden, else full.
    th = hidden
    for t in (512, 256, 128):
        if hidden % t == 0:
            th = t
            break

    def usage(tm_, th_):
        in_bytes = (tm_ * in_dim + 2 * in_dim * th_ + th_ * in_dim) * itemsize
        out_bytes = tm_ * in_dim * itemsize
        acc_bytes = tm_ * in_dim * 4
        return 2 * (in_bytes + out_bytes) + acc_bytes  # double-buffered

    # Shrink hidden tile, then row tile, until the working set fits the budget
    # (budget chosen to fit comfortably even in v7x's 64 MiB VMEM).
    while usage(tm, th) > budget_bytes and th % 256 == 0 and th > 128:
        th //= 2
    while usage(tm, th) > budget_bytes and tm % 32 == 0 and tm > 16:
        tm //= 2
    return tm, th


# -------------------------------- wrapper -----------------------------------

def mlp(x, gate_w, up_w, down_w, activation="silu"):
    """Gated MLP forward: down_proj(act(gate_proj(x)) * up_proj(x)).

    x:       [..., input_dim]
    gate_w:  [hidden_dim, input_dim]   (nn.Linear weight layout)
    up_w:    [hidden_dim, input_dim]
    down_w:  [input_dim, hidden_dim]
    """
    orig_shape = x.shape
    in_dim = orig_shape[-1]
    hidden = gate_w.shape[0]
    assert gate_w.shape == (hidden, in_dim)
    assert up_w.shape == (hidden, in_dim)
    assert down_w.shape == (in_dim, hidden)

    rows = math.prod(orig_shape[:-1])
    x2d = x.reshape(rows, in_dim)

    # Pre-transpose once so in-kernel dots are plain [M,K]x[K,N] MXU matmuls.
    wg_t = gate_w.T   # [in_dim, hidden]
    wu_t = up_w.T     # [in_dim, hidden]
    wd_t = down_w.T   # [hidden, in_dim]

    tm, th = _pick_tiles(rows, hidden, in_dim, x.dtype.itemsize)

    # Pad rows so row_tile is never constrained by batch*seq divisibility.
    m_pad = _round_up(rows, tm)
    if m_pad != rows:
        x2d = jnp.pad(x2d, ((0, m_pad - rows), (0, 0)))

    grid = (m_pad // tm, hidden // th)

    out = pl.pallas_call(
        functools.partial(_mlp_kernel, activation=activation),
        out_shape=jax.ShapeDtypeStruct((m_pad, in_dim), x.dtype),
        grid_spec=pltpu.PrefetchScalarGridSpec(
            num_scalar_prefetch=0,
            grid=grid,
            in_specs=[
                pl.BlockSpec((tm, in_dim), lambda i, h: (i, 0)),   # x tile
                pl.BlockSpec((in_dim, th), lambda i, h: (0, h)),   # Wg^T slab
                pl.BlockSpec((in_dim, th), lambda i, h: (0, h)),   # Wu^T slab
                pl.BlockSpec((th, in_dim), lambda i, h: (h, 0)),   # Wd^T slab
            ],
            out_specs=pl.BlockSpec((tm, in_dim), lambda i, h: (i, 0)),
            scratch_shapes=[pltpu.VMEM((tm, in_dim), jnp.float32)],
        ),
        compiler_params=pltpu.CompilerParams(
            dimension_semantics=("parallel", "arbitrary"),
            vmem_limit_bytes=48 * 1024 * 1024,
        ),
    )(x2d, wg_t, wu_t, wd_t)

    return out[:rows].reshape(orig_shape)


# ------------------------------- reference ----------------------------------

def mlp_ref(x, gate_w, up_w, down_w, activation="silu"):
    """Pure-JAX reference mirroring the PyTorch forward."""
    gate = jnp.einsum("...k,hk->...h", x, gate_w)
    up = jnp.einsum("...k,hk->...h", x, up_w)
    h = _apply_activation(gate, activation) * up
    return jnp.einsum("...h,kh->...k", h, down_w)


# ----------------------------------- test -----------------------------------

if __name__ == "__main__":
    # Small shapes consistent with the module: batch=2, seq=8,
    # input_dim=64, hidden_dim=128 (llama-style gated MLP, no bias).
    batch, seq, input_dim, hidden_dim = 2, 8, 64, 128

    key = jax.random.PRNGKey(0)
    kx, kg, ku, kd = jax.random.split(key, 4)

    x = jax.random.normal(kx, (batch, seq, input_dim), dtype=jnp.float32)
    gate_w = jax.random.normal(kg, (hidden_dim, input_dim), dtype=jnp.float32)
    gate_w = gate_w * (1.0 / input_dim ** 0.5)
    up_w = jax.random.normal(ku, (hidden_dim, input_dim), dtype=jnp.float32)
    up_w = up_w * (1.0 / input_dim ** 0.5)
    down_w = jax.random.normal(kd, (input_dim, hidden_dim), dtype=jnp.float32)
    down_w = down_w * (1.0 / hidden_dim ** 0.5)

    out = mlp(x, gate_w, up_w, down_w, activation="silu")
    out = jax.block_until_ready(out)

    ref = mlp_ref(x, gate_w, up_w, down_w, activation="silu")
    assert out.shape == x.shape and out.dtype == x.dtype
    # Loose tolerance covers MXU bf16-pass rounding differences; structural
    # bugs (wrong transpose / indexing) would be O(1) off.
    assert jnp.allclose(out, ref, atol=5e-2, rtol=5e-2), float(
        jnp.max(jnp.abs(out - ref)))

    print("KERNEL_OK")
</pallas_src>

<mosaic_0001>
module attributes {stable_mosaic.version = 11 : i64} {
  func.func @_mlp_kernel(%arg0: i32, %arg1: i32, %arg2: memref<16x64xf32, #tpu.memory_space<vmem>>, %arg3: memref<64x128xf32, #tpu.memory_space<vmem>>, %arg4: memref<64x128xf32, #tpu.memory_space<vmem>>, %arg5: memref<128x64xf32, #tpu.memory_space<vmem>>, %arg6: memref<16x64xf32, #tpu.memory_space<vmem>>, %arg7: memref<16x64xf32, #tpu.memory_space<vmem>>) attributes {dimension_semantics = [#tpu.dimension_semantics<parallel>, #tpu.dimension_semantics<arbitrary>], iteration_bounds = array<i64: 1, 1>, scalar_prefetch = 0 : i64, scratch_operands = 1 : i64, tpu.core_type = #tpu.core_type<tc>, window_params = [{transform_indices = @transform_0, window_bounds = array<i64: 16, 64>}, {transform_indices = @transform_1, window_bounds = array<i64: 64, 128>}, {transform_indices = @transform_2, window_bounds = array<i64: 64, 128>}, {transform_indices = @transform_3, window_bounds = array<i64: 128, 64>}, {transform_indices = @transform_4, window_bounds = array<i64: 16, 64>}]} {
    %c0_i32 = arith.constant 0 : i32
    %0 = arith.cmpi eq, %arg1, %c0_i32 : i32
    %1 = arith.extui %0 : i1 to i32
    %c0_i32_0 = arith.constant 0 : i32
    %2 = arith.cmpi ne, %1, %c0_i32_0 : i32
    scf.if %2 {
      %cst_17 = arith.constant 0.000000e+00 : f32
      %23 = vector.broadcast %cst_17 : f32 to vector<16x64xf32>
      %c0_18 = arith.constant 0 : index
      %c0_19 = arith.constant 0 : index
      %24 = vector.load %arg7[%c0_18, %c0_19] : memref<16x64xf32, #tpu.memory_space<vmem>>, vector<16x64xf32>
      tpu.vector_store %arg7[%c0_18, %c0_19], %23 {strides = array<i32>} : memref<16x64xf32, #tpu.memory_space<vmem>>, vector<16x64xf32>,
    } else {
    }
    %c0 = arith.constant 0 : index
    %c0_1 = arith.constant 0 : index
    %3 = vector.load %arg2[%c0, %c0_1] : memref<16x64xf32, #tpu.memory_space<vmem>>, vector<16x64xf32>
    %c0_2 = arith.constant 0 : index
    %c0_3 = arith.constant 0 : index
    %4 = vector.load %arg3[%c0_2, %c0_3] : memref<64x128xf32, #tpu.memory_space<vmem>>, vector<64x128xf32>
    %cst = arith.constant dense<0.000000e+00> : vector<16x128xf32>
    %5 = tpu.matmul %3, %4, %cst {dimension_numbers = #tpu.dot_dimension_numbers<[1], [0], [0], [1], [0, 0, 1, 1], [], []>} : vector<16x64xf32>, vector<64x128xf32>, vector<16x128xf32> -> vector<16x128xf32>
    %c0_4 = arith.constant 0 : index
    %c0_5 = arith.constant 0 : index
    %6 = vector.load %arg4[%c0_4, %c0_5] : memref<64x128xf32, #tpu.memory_space<vmem>>, vector<64x128xf32>
    %cst_6 = arith.constant dense<0.000000e+00> : vector<16x128xf32>
    %7 = tpu.matmul %3, %6, %cst_6 {dimension_numbers = #tpu.dot_dimension_numbers<[1], [0], [0], [1], [0, 0, 1, 1], [], []>} : vector<16x64xf32>, vector<64x128xf32>, vector<16x128xf32> -> vector<16x128xf32>
    %8 = arith.negf %5 : vector<16x128xf32>
    %9 = math.exp %8 : vector<16x128xf32>
    %cst_7 = arith.constant 1.000000e+00 : f32
    %10 = vector.broadcast %cst_7 : f32 to vector<16x128xf32>
    %11 = arith.addf %10, %9 : vector<16x128xf32>
    %12 = arith.divf %10, %11 : vector<16x128xf32>
    %13 = arith.mulf %5, %12 : vector<16x128xf32>
    %14 = arith.mulf %13, %7 : vector<16x128xf32>
    %c0_8 = arith.constant 0 : index
    %c0_9 = arith.constant 0 : index
    %15 = vector.load %arg7[%c0_8, %c0_9] : memref<16x64xf32, #tpu.memory_space<vmem>>, vector<16x64xf32>
    %c0_10 = arith.constant 0 : index
    %c0_11 = arith.constant 0 : index
    %16 = vector.load %arg5[%c0_10, %c0_11] : memref<128x64xf32, #tpu.memory_space<vmem>>, vector<128x64xf32>
    %cst_12 = arith.constant dense<0.000000e+00> : vector<16x64xf32>
    %17 = tpu.matmul %14, %16, %cst_12 {dimension_numbers = #tpu.dot_dimension_numbers<[1], [0], [0], [1], [0, 0, 1, 1], [], []>} : vector<16x128xf32>, vector<128x64xf32>, vector<16x64xf32> -> vector<16x64xf32>
    %18 = arith.addf %15, %17 : vector<16x64xf32>
    %c0_13 = arith.constant 0 : index
    %c0_14 = arith.constant 0 : index
    %19 = vector.load %arg7[%c0_13, %c0_14] : memref<16x64xf32, #tpu.memory_space<vmem>>, vector<16x64xf32>
    tpu.vector_store %arg7[%c0_13, %c0_14], %18 {strides = array<i32>} : memref<16x64xf32, #tpu.memory_space<vmem>>, vector<16x64xf32>,
    %c0_i32_15 = arith.constant 0 : i32
    %20 = arith.cmpi eq, %arg1, %c0_i32_15 : i32
    %21 = arith.extui %20 : i1 to i32
    %c0_i32_16 = arith.constant 0 : i32
    %22 = arith.cmpi ne, %21, %c0_i32_16 : i32
    scf.if %22 {
      %c0_17 = arith.constant 0 : index
      %c0_18 = arith.constant 0 : index
      %23 = vector.load %arg7[%c0_17, %c0_18] : memref<16x64xf32, #tpu.memory_space<vmem>>, vector<16x64xf32>
      %c0_19 = arith.constant 0 : index
      %c0_20 = arith.constant 0 : index
      %24 = vector.load %arg6[%c0_19, %c0_20] : memref<16x64xf32, #tpu.memory_space<vmem>>, vector<16x64xf32>
      tpu.vector_store %arg6[%c0_19, %c0_20], %23 {strides = array<i32>} : memref<16x64xf32, #tpu.memory_space<vmem>>, vector<16x64xf32>,
    } else {
    }
    return
  }
  func.func @transform_0(%arg0: i32, %arg1: i32) -> (i32, i32) {
    %c0_i32 = arith.constant 0 : i32
    %c0_i32_0 = arith.constant 0 : i32
    return %arg0, %c0_i32 : i32, i32
  }
  func.func @transform_1(%arg0: i32, %arg1: i32) -> (i32, i32) {
    %c0_i32 = arith.constant 0 : i32
    %c0_i32_0 = arith.constant 0 : i32
    return %c0_i32, %arg1 : i32, i32
  }
  func.func @transform_2(%arg0: i32, %arg1: i32) -> (i32, i32) {
    %c0_i32 = arith.constant 0 : i32
    %c0_i32_0 = arith.constant 0 : i32
    return %c0_i32, %arg1 : i32, i32
  }
  func.func @transform_3(%arg0: i32, %arg1: i32) -> (i32, i32) {
    %c0_i32 = arith.constant 0 : i32
    %c0_i32_0 = arith.constant 0 : i32
    return %arg1, %c0_i32 : i32, i32
  }
  func.func @transform_4(%arg0: i32, %arg1: i32) -> (i32, i32) {
    %c0_i32 = arith.constant 0 : i32
    %c0_i32_0 = arith.constant 0 : i32
    return %arg0, %c0_i32 : i32, i32
  }
}

</mosaic_0001>

<llo_original>
// kernel: tpu_custom_call.1
$region0: #{tpu_custom_call.1}
  #allocation0 [shape = 'u32[]', space=smem, size = 0x4, offset = 0x4, fixed_abs, tag = 'smem constant byte address 0x4 - core index']
  #allocation1 [shape = 'u32[144,128]{1,0:T(1,128)}', space=vmem, size = 0x12000, scoped, tag = 'internal scratch']
  #allocation2 [shape = 'f32[16,64]{1,0:T(8,128)}', space=vmem, size = 0x2000, scoped, tag = 'scratch operand']
  %s0 = inlined_call_operand.vmem [shape: f32[16,64], index: 0, kind: input, shape index: {}]
  %s1 = inlined_call_operand.vmem [shape: f32[64,128], index: 1, kind: input, shape index: {}]
  %s2 = inlined_call_operand.vmem [shape: f32[64,128], index: 2, kind: input, shape index: {}]
  %s3 = inlined_call_operand.vmem [shape: f32[128,64], index: 3, kind: input, shape index: {}]
  %s4 = inlined_call_operand.hbm [shape: f32[16,64], index: 4, kind: output, shape index: {}]
  %s5 = sld [smem:[#allocation0]]
  $region34: #{tpu_custom_call.1} parent=0
    _
  %s7 = ssub.s32 1, %s5
  %s8 = scalar_select 0, %s7, %s5
  $region1: #{tpu_custom_call.1} parent=0
    #allocation3 [shape = 'u8[8192]{0}', space=vmem, size = 0x2000, scoped, tag = 'output window, operand 0, single buffered']
    #allocation4 [shape = 's32[1]{0}', space=sflag, size = 0x4, scoped, tag = 'scoped memory for tpu_custom_call.1']
    %9 = vsyncpa [#allocation4], 0
    // Predicated region
    $region2: #{tpu_custom_call.1} parent=1 // pred_check
      _
    $region3: #{tpu_custom_call.1} parent=1 // pred_check_branch
      %11 = sbr.rel (0) target = $region5
    $region4: #{tpu_custom_call.1} parent=1 // pred_region
      _
    $region5: #{tpu_custom_call.1} parent=1 // pred_fallthru
      _
    // Predicated region
    $region6: #{tpu_custom_call.1} parent=1 // pred_check
      _
    $region7: #{tpu_custom_call.1} parent=1 // pred_check_branch
      %13 = sbr.rel (0) target = $region9
    $region8: #{tpu_custom_call.1} parent=1 // pred_region
      _
    $region9: #{tpu_custom_call.1} parent=1 // pred_fallthru
      _
    // Predicated region
    $region10: #{tpu_custom_call.1} parent=1 // pred_check
      _
    $region11: #{tpu_custom_call.1} parent=1 // pred_check_branch
      %15 = sbr.rel (0) target = $region13
    $region12: #{tpu_custom_call.1} parent=1 // pred_region
      _
    $region13: #{tpu_custom_call.1} parent=1 // pred_fallthru
      _
    // Predicated region
    $region14: #{tpu_custom_call.1} parent=1 // pred_check
      _
    $region15: #{tpu_custom_call.1} parent=1 // pred_check_branch
      %17 = sbr.rel (0) target = $region17
    $region16: #{tpu_custom_call.1} parent=1 // pred_region
      _
    $region17: #{tpu_custom_call.1} parent=1 // pred_fallthru
      _
    %p18 = scmp.eq.s32.totalorder 0, 0
    // Predicated region
    $region18: #{tpu_custom_call.1} parent=1 // pred_check
      %p19 = pneg %p18
    $region19: #{tpu_custom_call.1} parent=1 // pred_check_branch
      %21 = sbr.rel (%p19) target = $region21
    $region20: #{tpu_custom_call.1} parent=1 // pred_region
      %vm22 = vcmask 523264
      %23 = vst.msk [vmem:[#allocation2] sm:$0xff] %vm22, 0.0
      %24 = vst.msk [vmem:[#allocation2 + $0x8] sm:$0xff] %vm22, 0.0
    $region21: #{tpu_custom_call.1} parent=1 // pred_fallthru
      _
    %v25 = vld [vmem:[%s0] sm:$0xff]
    %v26 = vld [vmem:[%s0 + $0x8] sm:$0xff]
    %v27 = vld [vmem:[%s1] sm:$0xff]
    %v28 = vld [vmem:[%s1 + $0x8] sm:$0xff]
    %v29 = vld [vmem:[%s1 + $0x10] sm:$0xff]
    %v30 = vld [vmem:[%s1 + $0x18] sm:$0xff]
    %v31 = vld [vmem:[%s1 + $0x20] sm:$0xff]
    %v32 = vld [vmem:[%s1 + $0x28] sm:$0xff]
    %v33 = vld [vmem:[%s1 + $0x30] sm:$0xff]
    %v34 = vld [vmem:[%s1 + $0x38] sm:$0xff]
    %vm35 = vcmask 523264
    %v37 = vsel %vm35, %v25, 0
    %v40 = vsel %vm35, %v26, 0
    %42 = vmatprep.subr.mxu0 0.0
    %43 = vmatpush1.msra.mxu0 0.0
    %44 = vmatprep.subr.mxu0 0.0
    %45 = vmatpush1.msra.mxu0 0.0
    %46 = vmatprep.subr.mxu0 0.0
    %47 = vmatpush1.msra.mxu0 0.0
    %48 = vmatprep.subr.mxu0 0.0
    %49 = vmatpush1.msra.mxu0 0.0
    %50 = vmatprep.subr.mxu0 0.0
    %51 = vmatpush1.msra.mxu0 0.0
    %52 = vmatprep.subr.mxu0 0.0
    %53 = vmatpush1.msra.mxu0 0.0
    %54 = vmatprep.subr.mxu0 0.0
    %55 = vmatpush1.msra.mxu0 0.0
    %56 = vmatprep.subr.mxu0 0.0
    %57 = vmatpush1.msra.mxu0 0.0
    %58 = vmatprep.subr.mxu0 0.0
    %59 = vmatpush1.msra.mxu0 %v34
    %60 = vmatprep.subr.mxu0 0.0
    %61 = vmatpush1.msra.mxu0 %v33
    %62 = vmatprep.subr.mxu0 0.0
    %63 = vmatpush1.msra.mxu0 %v32
    %64 = vmatprep.subr.mxu0 0.0
    %65 = vmatpush1.msra.mxu0 %v31
    %66 = vmatprep.subr.mxu0 0.0
    %67 = vmatpush1.msra.mxu0 %v30
    %68 = vmatprep.subr.mxu0 0.0
    %69 = vmatpush1.msra.mxu0 %v29
    %70 = vmatprep.subr.mxu0 0.0
    %71 = vmatpush1.msra.mxu0 %v28
    %72 = vmatprep.subr.mxu0 0.0
    %73 = vmatpush1.msra.mxu0 %v27
    %74 = vmatprep.subr.mxu0 0.0
    %75 = vmatpush2.msra.mxu0 0.0
    %76 = vmatprep.subr.mxu0 0.0
    %77 = vmatpush2.msra.mxu0 0.0
    %78 = vmatprep.subr.mxu0 0.0
    %79 = vmatpush2.msra.mxu0 0.0
    %80 = vmatprep.subr.mxu0 0.0
    %81 = vmatpush2.msra.mxu0 0.0
    %82 = vmatprep.subr.mxu0 0.0
    %83 = vmatpush2.msra.mxu0 0.0
    %84 = vmatprep.subr.mxu0 0.0
    %85 = vmatpush2.msra.mxu0 0.0
    %86 = vmatprep.subr.mxu0 0.0
    %87 = vmatpush2.msra.mxu0 0.0
    %88 = vmatprep.subr.mxu0 0.0
    %89 = vmatpush2.msra.mxu0 0.0
    %90 = vmatprep.subr.mxu0 0.0
    %91 = vmatpush2.msra.mxu0 0.0
    %92 = vmatprep.subr.mxu0 0.0
    %93 = vmatpush2.msra.mxu0 0.0
    %94 = vmatprep.subr.mxu0 0.0
    %95 = vmatpush2.msra.mxu0 0.0
    %96 = vmatprep.subr.mxu0 0.0
    %97 = vmatpush2.msra.mxu0 0.0
    %98 = vmatprep.subr.mxu0 0.0
    %99 = vmatpush2.msra.mxu0 0.0
    %100 = vmatprep.subr.mxu0 0.0
    %101 = vmatpush2.msra.mxu0 0.0
    %102 = vmatprep.subr.mxu0 0.0
    %103 = vmatpush2.msra.mxu0 0.0
    %104 = vmatprep.subr.mxu0 0.0
    %105 = vmatpush2.msra.mxu0 0.0
    %106 = vmatprep.mubr.f32.mxu0 0.0
    %107 = vmatmul.mubr.f32.gmra.mxu0 %v37
    %v108 = vpop.f32.mrf.mxu0
    %v109 = vadd.f32 0.0, %v108
    %v110 = vpop.f32.mrf.mxu0
    %111 = vmatprep.mubr.f32.mxu0 0.0
    %112 = vmatmul.mubr.f32.gmra.mxu0 %v40
    %v113 = vpop.f32.mrf.mxu0
    %v114 = vadd.f32 0.0, %v113
    %v115 = vpop.f32.mrf.mxu0
    %116 = vdwg.mxu0
    %v117 = vld [vmem:[%s2] sm:$0xff]
    %v118 = vld [vmem:[%s2 + $0x8] sm:$0xff]
    %v119 = vld [vmem:[%s2 + $0x10] sm:$0xff]
    %v120 = vld [vmem:[%s2 + $0x18] sm:$0xff]
    %v121 = vld [vmem:[%s2 + $0x20] sm:$0xff]
    %v122 = vld [vmem:[%s2 + $0x28] sm:$0xff]
    %v123 = vld [vmem:[%s2 + $0x30] sm:$0xff]
    %v124 = vld [vmem:[%s2 + $0x38] sm:$0xff]
    %125 = vmatprep.subr.mxu0 0.0
    %126 = vmatpush1.msra.mxu0 0.0
    %127 = vmatprep.subr.mxu0 0.0
    %128 = vmatpush1.msra.mxu0 0.0
    %129 = vmatprep.subr.mxu0 0.0
    %130 = vmatpush1.msra.mxu0 0.0
    %131 = vmatprep.subr.mxu0 0.0
    %132 = vmatpush1.msra.mxu0 0.0
    %133 = vmatprep.subr.mxu0 0.0
    %134 = vmatpush1.msra.mxu0 0.0
    %135 = vmatprep.subr.mxu0 0.0
    %136 = vmatpush1.msra.mxu0 0.0
    %137 = vmatprep.subr.mxu0 0.0
    %138 = vmatpush1.msra.mxu0 0.0
    %139 = vmatprep.subr.mxu0 0.0
    %140 = vmatpush1.msra.mxu0 0.0
    %141 = vmatprep.subr.mxu0 0.0
    %142 = vmatpush1.msra.mxu0 %v124
    %143 = vmatprep.subr.mxu0 0.0
    %144 = vmatpush1.msra.mxu0 %v123
    %145 = vmatprep.subr.mxu0 0.0
    %146 = vmatpush1.msra.mxu0 %v122
    %147 = vmatprep.subr.mxu0 0.0
    %148 = vmatpush1.msra.mxu0 %v121
    %149 = vmatprep.subr.mxu0 0.0
    %150 = vmatpush1.msra.mxu0 %v120
    %151 = vmatprep.subr.mxu0 0.0
    %152 = vmatpush1.msra.mxu0 %v119
    %153 = vmatprep.subr.mxu0 0.0
    %154 = vmatpush1.msra.mxu0 %v118
    %155 = vmatprep.subr.mxu0 0.0
    %156 = vmatpush1.msra.mxu0 %v117
    %157 = vmatprep.subr.mxu0 0.0
    %158 = vmatpush2.msra.mxu0 0.0
    %159 = vmatprep.subr.mxu0 0.0
    %160 = vmatpush2.msra.mxu0 0.0
    %161 = vmatprep.subr.mxu0 0.0
    %162 = vmatpush2.msra.mxu0 0.0
    %163 = vmatprep.subr.mxu0 0.0
    %164 = vmatpush2.msra.mxu0 0.0
    %165 = vmatprep.subr.mxu0 0.0
    %166 = vmatpush2.msra.mxu0 0.0
    %167 = vmatprep.subr.mxu0 0.0
    %168 = vmatpush2.msra.mxu0 0.0
    %169 = vmatprep.subr.mxu0 0.0
    %170 = vmatpush2.msra.mxu0 0.0
    %171 = vmatprep.subr.mxu0 0.0
    %172 = vmatpush2.msra.mxu0 0.0
    %173 = vmatprep.subr.mxu0 0.0
    %174 = vmatpush2.msra.mxu0 0.0
    %175 = vmatprep.subr.mxu0 0.0
    %176 = vmatpush2.msra.mxu0 0.0
    %177 = vmatprep.subr.mxu0 0.0
    %178 = vmatpush2.msra.mxu0 0.0
    %179 = vmatprep.subr.mxu0 0.0
    %180 = vmatpush2.msra.mxu0 0.0
    %181 = vmatprep.subr.mxu0 0.0
    %182 = vmatpush2.msra.mxu0 0.0
    %183 = vmatprep.subr.mxu0 0.0
    %184 = vmatpush2.msra.mxu0 0.0
    %185 = vmatprep.subr.mxu0 0.0
    %186 = vmatpush2.msra.mxu0 0.0
    %187 = vmatprep.subr.mxu0 0.0
    %188 = vmatpush2.msra.mxu0 0.0
    %189 = vmatprep.mubr.f32.mxu0 0.0
    %190 = vmatmul.mubr.f32.gmra.mxu0 %v37
    %v191 = vpop.f32.mrf.mxu0
    %v192 = vadd.f32 0.0, %v191
    %v193 = vpop.f32.mrf.mxu0
    %194 = vmatprep.mubr.f32.mxu0 0.0
    %195 = vmatmul.mubr.f32.gmra.mxu0 %v40
    %v196 = vpop.f32.mrf.mxu0
    %v197 = vadd.f32 0.0, %v196
    %v198 = vpop.f32.mrf.mxu0
    %199 = vdwg.mxu0
    %v200 = vxor.u32 %v109, 2147483648
    %v201 = vxor.u32 %v114, 2147483648
    %v202 = vmul.f32 %v200, 1.442695
    %v203 = vpow.pop %v202
    %v204 = vmul.f32 %v201, 1.442695
    %v205 = vpow.pop %v204
    %v206 = vadd.f32 %v203, 1.0
    %v207 = vadd.f32 %v205, 1.0
    %v208 = vrcp.pop %v206
    %v209 = vmul.f32 1.0, %v208
    %v210 = vrcp.pop %v207
    %v211 = vmul.f32 1.0, %v210
    %v212 = vmul.f32 %v109, %v209
    %v213 = vmul.f32 %v114, %v211
    %v214 = vmul.f32 %v212, %v192
    %v215 = vmul.f32 %v213, %v197
    %v216 = vld [vmem:[#allocation2] sm:$0xff]
    %v217 = vld [vmem:[#allocation2 + $0x8] sm:$0xff]
    %v218 = vld [vmem:[%s3] sm:$0xff]
    %v219 = vld [vmem:[%s3 + $0x8] sm:$0xff]
    %v220 = vld [vmem:[%s3 + $0x10] sm:$0xff]
    %v221 = vld [vmem:[%s3 + $0x18] sm:$0xff]
    %v222 = vld [vmem:[%s3 + $0x20] sm:$0xff]
    %v223 = vld [vmem:[%s3 + $0x28] sm:$0xff]
    %v224 = vld [vmem:[%s3 + $0x30] sm:$0xff]
    %v225 = vld [vmem:[%s3 + $0x38] sm:$0xff]
    %v226 = vld [vmem:[%s3 + $0x40] sm:$0xff]
    %v227 = vld [vmem:[%s3 + $0x48] sm:$0xff]
    %v228 = vld [vmem:[%s3 + $0x50] sm:$0xff]
    %v229 = vld [vmem:[%s3 + $0x58] sm:$0xff]
    %v230 = vld [vmem:[%s3 + $0x60] sm:$0xff]
    %v231 = vld [vmem:[%s3 + $0x68] sm:$0xff]
    %v232 = vld [vmem:[%s3 + $0x70] sm:$0xff]
    %v233 = vld [vmem:[%s3 + $0x78] sm:$0xff]
    %234 = vmatprep.subr.mxu0 0.0
    %235 = vmatpush1.msra.mxu0 %v233
    %236 = vmatprep.subr.mxu0 0.0
    %237 = vmatpush1.msra.mxu0 %v232
    %238 = vmatprep.subr.mxu0 0.0
    %239 = vmatpush1.msra.mxu0 %v231
    %240 = vmatprep.subr.mxu0 0.0
    %241 = vmatpush1.msra.mxu0 %v230
    %242 = vmatprep.subr.mxu0 0.0
    %243 = vmatpush1.msra.mxu0 %v229
    %244 = vmatprep.subr.mxu0 0.0
    %245 = vmatpush1.msra.mxu0 %v228
    %246 = vmatprep.subr.mxu0 0.0
    %247 = vmatpush1.msra.mxu0 %v227
    %248 = vmatprep.subr.mxu0 0.0
    %249 = vmatpush1.msra.mxu0 %v226
    %250 = vmatprep.subr.mxu0 0.0
    %251 = vmatpush1.msra.mxu0 %v225
    %252 = vmatprep.subr.mxu0 0.0
    %253 = vmatpush1.msra.mxu0 %v224
    %254 = vmatprep.subr.mxu0 0.0
    %255 = vmatpush1.msra.mxu0 %v223
    %256 = vmatprep.subr.mxu0 0.0
    %257 = vmatpush1.msra.mxu0 %v222
    %258 = vmatprep.subr.mxu0 0.0
    %259 = vmatpush1.msra.mxu0 %v221
    %260 = vmatprep.subr.mxu0 0.0
    %261 = vmatpush1.msra.mxu0 %v220
    %262 = vmatprep.subr.mxu0 0.0
    %263 = vmatpush1.msra.mxu0 %v219
    %264 = vmatprep.subr.mxu0 0.0
    %265 = vmatpush1.msra.mxu0 %v218
    %266 = vmatprep.subr.mxu0 0.0
    %267 = vmatpush2.msra.mxu0 0.0
    %268 = vmatprep.subr.mxu0 0.0
    %269 = vmatpush2.msra.mxu0 0.0
    %270 = vmatprep.subr.mxu0 0.0
    %271 = vmatpush2.msra.mxu0 0.0
    %272 = vmatprep.subr.mxu0 0.0
    %273 = vmatpush2.msra.mxu0 0.0
    %274 = vmatprep.subr.mxu0 0.0
    %275 = vmatpush2.msra.mxu0 0.0
    %276 = vmatprep.subr.mxu0 0.0
    %277 = vmatpush2.msra.mxu0 0.0
    %278 = vmatprep.subr.mxu0 0.0
    %279 = vmatpush2.msra.mxu0 0.0
    %280 = vmatprep.subr.mxu0 0.0
    %281 = vmatpush2.msra.mxu0 0.0
    %282 = vmatprep.subr.mxu0 0.0
    %283 = vmatpush2.msra.mxu0 0.0
    %284 = vmatprep.subr.mxu0 0.0
    %285 = vmatpush2.msra.mxu0 0.0
    %286 = vmatprep.subr.mxu0 0.0
    %287 = vmatpush2.msra.mxu0 0.0
    %288 = vmatprep.subr.mxu0 0.0
    %289 = vmatpush2.msra.mxu0 0.0
    %290 = vmatprep.subr.mxu0 0.0
    %291 = vmatpush2.msra.mxu0 0.0
    %292 = vmatprep.subr.mxu0 0.0
    %293 = vmatpush2.msra.mxu0 0.0
    %294 = vmatprep.subr.mxu0 0.0
    %295 = vmatpush2.msra.mxu0 0.0
    %296 = vmatprep.subr.mxu0 0.0
    %297 = vmatpush2.msra.mxu0 0.0
    %298 = vmatprep.mubr.f32.mxu0 0.0
    %299 = vmatmul.mubr.f32.gmra.mxu0 %v214
    %v300 = vpop.f32.mrf.mxu0
    %v301 = vadd.f32 0.0, %v300
    %v302 = vpop.f32.mrf.mxu0
    %303 = vmatprep.mubr.f32.mxu0 0.0
    %304 = vmatmul.mubr.f32.gmra.mxu0 %v215
    %v305 = vpop.f32.mrf.mxu0
    %v306 = vadd.f32 0.0, %v305
    %v307 = vpop.f32.mrf.mxu0
    %308 = vdwg.mxu0
    %v309 = vadd.f32 %v216, %v301
    %v310 = vadd.f32 %v217, %v306
    %311 = vst.msk [vmem:[#allocation2] sm:$0xff] %vm35, %v309
    %312 = vst.msk [vmem:[#allocation2 + $0x8] sm:$0xff] %vm35, %v310
    // Predicated region
    $region22: #{tpu_custom_call.1} parent=1 // pred_check
      %p313 = pneg %p18
    $region23: #{tpu_custom_call.1} parent=1 // pred_check_branch
      %315 = sbr.rel (%p313) target = $region25
    $region24: #{tpu_custom_call.1} parent=1 // pred_region
      %v316 = vld [vmem:[#allocation2] sm:$0xff]
      %v317 = vld [vmem:[#allocation2 + $0x8] sm:$0xff]
      %318 = vst.msk [vmem:[#allocation3] sm:$0xff] %vm35, %v316
      %319 = vst.msk [vmem:[#allocation3 + $0x8] sm:$0xff] %vm35, %v317
    $region25: #{tpu_custom_call.1} parent=1 // pred_fallthru
      _
    // Predicated region
    $region26: #{tpu_custom_call.1} parent=1 // pred_check
      _
    $region27: #{tpu_custom_call.1} parent=1 // pred_check_branch
      %321 = sbr.rel (0) target = $region29
    $region28: #{tpu_custom_call.1} parent=1 // pred_region
      %s323 = ssub.s32 256, 256
      %324 = vsyncadd [#allocation4], %s323
      %s325 = sshll.u32 [#allocation3], 4
      %s326 = int_to_ptr.vmem [resolvable:$true] %s325
      %331 = dma.vmem_to_hbm [thread:$0]  %s326, 256, %s4, [#allocation4], 128, 128, 8
    $region29: #{tpu_custom_call.1} parent=1 // pred_fallthru
      _
    // Predicated region
    $region30: #{tpu_custom_call.1} parent=1 // pred_check
      _
    $region31: #{tpu_custom_call.1} parent=1 // pred_check_branch
      %333 = sbr.rel (0) target = $region33
    $region32: #{tpu_custom_call.1} parent=1 // pred_region
      %334 = dma.done [#allocation4], 256
    $region33: #{tpu_custom_call.1} parent=1 // pred_fallthru
      _
    %335 = vsyncpa [#allocation4], 1

</llo_original>
